<compile_context>
chip_gen: v7x
topology: tpu7x:2x2x1
jax: 0.10.0
libtpu: 0.0.40
codegen_flags: <defaults>
</compile_context>

<pallas_src>
import functools

import jax
import jax.numpy as jnp
from jax.experimental import pallas as pl
from jax.experimental.pallas import tpu as pltpu

LANE = 128          # vreg lane width
LANE_CHUNK = 512    # in-kernel batch chunk (lanes); (32, 512) f32 h = 16 vregs

_SUPPORTED_ACTS = (None, "tanh")


def _round_up(n, m):
    return ((n + m - 1) // m) * m


def _cdiv(a, b):
    return (a + b - 1) // b


def _validate_acts(layers_data):
    for _size, act in layers_data:
        if act not in _SUPPORTED_ACTS:
            raise ValueError(
                f"Unsupported activation {act!r}; supported: {_SUPPORTED_ACTS}")


def prepare_mlp_params(params, layers_data):
    """One-time host prep: transpose weights / reshape biases for the kernel.

    params: [(w (in, out), b (out,)), ...]  with y = x @ w + b (nn.Linear).
    Returns a flat tuple of constant device arrays; compute ONCE and reuse.
    """
    _validate_acts(layers_data)
    n_layers = len(params)
    prepped = []
    for li, (w, b) in enumerate(params):
        w = jnp.asarray(w, jnp.float32)
        b = jnp.asarray(b, jnp.float32)
        k, n = w.shape
        if li == n_layers - 1 and n == 1:
            # Final out_features == 1: keep the weight as a (k, 1) column for a
            # VPU multiply + cross-sublane reduce (no MXU, no lane broadcast).
            prepped += [w.reshape(k, 1), b.reshape(1, 1)]
        else:
            prepped += [w.T, b.reshape(n, 1)]            # (n, k), (n, 1)
    return tuple(prepped)


def _fused_mlp_kernel(*refs, acts, chunk, last_is_reduction):
    """Whole MLP fused, transposed layout: h^T = act(W^T @ h^T + b).

    refs = (x_ref (in_f, TB), w0, b0, w1, b1, ..., o_ref (out_f, TB)).
    The lane (batch) axis is processed in `chunk`-wide slices so live
    activations stay small regardless of the tile size.
    """
    x_ref = refs[0]
    o_ref = refs[-1]
    layer_refs = refs[1:-1]
    n_layers = len(layer_refs) // 2

    # Tiny, loop-invariant weights: load once per grid step, reuse per chunk.
    ws = [layer_refs[2 * i][...] for i in range(n_layers)]
    bs = [layer_refs[2 * i + 1][...] for i in range(n_layers)]

    n_chunks = x_ref.shape[-1] // chunk

    @pl.loop(0, n_chunks)
    def _(c):
        start = pl.multiple_of(c * chunk, chunk)
        h = x_ref[:, pl.ds(start, chunk)]                      # (in_f, chunk)
        for li in range(n_layers):
            w, b = ws[li], bs[li]
            if li == n_layers - 1 and last_is_reduction:
                # out_features == 1: VPU multiply + cross-sublane (XLU) reduce.
                h = jnp.sum(h * w, axis=0, keepdims=True) + b  # (1, chunk)
            elif h.shape[0] <= 8:
                # Tiny contracting dim (layer 1, K = in_f = 4): rank-1 VPU
                # updates instead of an MXU dot over a 4-wide K.
                acc = w[:, 0:1] * h[0:1, :]
                for kk in range(1, h.shape[0]):
                    acc = acc + w[:, kk:kk + 1] * h[kk:kk + 1, :]
                h = acc + b
            else:
                h = jnp.dot(w, h, preferred_element_type=jnp.float32) + b
            if acts[li] == "tanh":
                h = jnp.tanh(h)
        o_ref[:, pl.ds(start, chunk)] = h.astype(o_ref.dtype)


def mlp_forward(x, prepped_params, layers_data, *,
                batch_tile=65536, single_call_max=131072):
    """Fused Pallas MLP forward.

    x: (B, in_f).  prepped_params: output of prepare_mlp_params (constant data;
    prepare once and reuse across calls).  Returns (B, out_f) float32.
    """
    _validate_acts(layers_data)
    B, in_f = x.shape
    acts = tuple(act for _size, act in layers_data)
    out_f = layers_data[-1][0]
    last_is_reduction = (out_f == 1)
    n_layers = len(layers_data)
    assert len(prepped_params) == 2 * n_layers

    # ---- lane (batch) tiling -------------------------------------------------
    if B <= single_call_max:
        chunk = min(LANE_CHUNK, _round_up(B, LANE))
        n_tiles = 1
        tb = Bp = _round_up(B, chunk)
    else:
        chunk = LANE_CHUNK
        tile = max(_round_up(batch_tile, chunk), chunk)
        n_tiles = _cdiv(B, tile)
        if n_tiles % 2:
            n_tiles += 1            # even step count: both v7x TCs stay busy
        tb = _round_up(_cdiv(B, n_tiles), chunk)
        Bp = n_tiles * tb

    # ---- host prep: x^T with batch on the lane axis (single small copy pass).
    x_f = jnp.asarray(x, jnp.float32)
    if Bp == B:
        x_t = x_f.T
    else:
        x_t = jnp.zeros((in_f, Bp), jnp.float32).at[:, :B].set(x_f.T)

    kernel = functools.partial(_fused_mlp_kernel, acts=acts, chunk=chunk,
                               last_is_reduction=last_is_reduction)

    # Advisory cost hint computed from the TRUE (unpadded) problem sizes.
    flops = 0
    fin = in_f
    for size, _act in layers_data:
        flops += 2 * B * fin * size
        fin = size
    trans = B * sum(size for size, act in layers_data if act == "tanh")
    bytes_acc = 4 * (B * in_f + B * out_f
                     + sum(int(p.size) for p in prepped_params))
    cost = pl.CostEstimate(flops=int(flops), transcendentals=int(trans),
                           bytes_accessed=int(bytes_acc))

    out_shape = jax.ShapeDtypeStruct((out_f, Bp), jnp.float32)
    operands = (x_t,) + tuple(prepped_params)

    if n_tiles == 1:
        # Small/moderate batch: single invocation, no grid machinery; every
        # operand is whole-array resident in VMEM (a few MiB at most).
        out_t = pl.pallas_call(
            kernel,
            out_shape=out_shape,
            in_specs=[pl.BlockSpec(memory_space=pltpu.MemorySpace.VMEM)
                      for _ in operands],
            out_specs=pl.BlockSpec(memory_space=pltpu.MemorySpace.VMEM),
            cost_estimate=cost,
        )(*operands)
    else:
        # Large batch: tile the lane (batch) axis with big steps; weights use a
        # constant index_map so they stay VMEM-resident across steps.  Per-step
        # VMEM (double-buffered (in_f, tb) + (out_f, tb) f32 blocks) stays well
        # under v7x's 32 MiB scoped default, so no vmem_limit override needed.
        in_specs = [pl.BlockSpec((in_f, tb), lambda i: (0, i))]
        for p in prepped_params:
            in_specs.append(pl.BlockSpec(p.shape, lambda i: (0, 0)))
        out_t = pl.pallas_call(
            kernel,
            out_shape=out_shape,
            grid=(n_tiles,),
            in_specs=in_specs,
            out_specs=pl.BlockSpec((out_f, tb), lambda i: (0, i)),
            compiler_params=pltpu.CompilerParams(
                dimension_semantics=("parallel",)),
            cost_estimate=cost,
        )(*operands)

    return out_t[:, :B].T


def init_mlp_params(key, input_size, layers_data):
    """Deterministic params mimicking nn.Linear's default U(-1/sqrt(in), 1/sqrt(in))."""
    params = []
    in_f = input_size
    for size, _act in layers_data:
        key, kw, kb = jax.random.split(key, 3)
        bound = 1.0 / jnp.sqrt(jnp.float32(in_f))
        w = jax.random.uniform(kw, (in_f, size), jnp.float32, -bound, bound)
        b = jax.random.uniform(kb, (size,), jnp.float32, -bound, bound)
        params.append((w, b))
        in_f = size
    return params


def mlp_forward_ref(x, params, layers_data):
    """Plain-JAX reference (same semantics as the PyTorch module)."""
    for (w, b), (_size, act) in zip(params, layers_data):
        x = x @ w + b
        if act == "tanh":
            x = jnp.tanh(x)
    return x


if __name__ == "__main__":
    key = jax.random.PRNGKey(0)

    input_size = 4
    layers_data = [(32, "tanh"), (32, "tanh"), (1, None)]

    kp, kx1, kx2, kx3 = jax.random.split(key, 4)
    params = init_mlp_params(kp, input_size, layers_data)
    prepped = prepare_mlp_params(params, layers_data)   # hoisted; reused below

    # Small batch -> single no-grid invocation.
    x1 = jax.random.normal(kx1, (8, input_size), jnp.float32)
    out1 = jax.block_until_ready(mlp_forward(x1, prepped, layers_data))
    ref1 = mlp_forward_ref(x1, params, layers_data)
    assert out1.shape == (8, 1)
    assert jnp.allclose(out1, ref1, atol=1e-5, rtol=1e-5)

    # Moderate, non-aligned batch -> still a single invocation.
    x2 = jax.random.normal(kx2, (1030, input_size), jnp.float32)
    out2 = jax.block_until_ready(mlp_forward(x2, prepped, layers_data))
    ref2 = mlp_forward_ref(x2, params, layers_data)
    assert out2.shape == (1030, 1)
    assert jnp.allclose(out2, ref2, atol=1e-5, rtol=1e-5)

    # Exercise the lane-tiled (even step count) grid path at a small size by
    # lowering the thresholds; production defaults keep B <= 128K in one call.
    x3 = jax.random.normal(kx3, (2200, input_size), jnp.float32)
    out3 = jax.block_until_ready(
        mlp_forward(x3, prepped, layers_data, batch_tile=512,
                    single_call_max=1024))
    ref3 = mlp_forward_ref(x3, params, layers_data)
    assert out3.shape == (2200, 1)
    assert jnp.allclose(out3, ref3, atol=1e-5, rtol=1e-5)

    print("KERNEL_OK")
</pallas_src>

<mosaic_0001>
module attributes {stable_mosaic.version = 11 : i64} {
  func.func @_fused_mlp_kernel(%arg0: memref<4x128xf32, #tpu.memory_space<vmem>>, %arg1: memref<32x4xf32, #tpu.memory_space<vmem>>, %arg2: memref<32x1xf32, #tpu.memory_space<vmem>>, %arg3: memref<32x32xf32, #tpu.memory_space<vmem>>, %arg4: memref<32x1xf32, #tpu.memory_space<vmem>>, %arg5: memref<32x1xf32, #tpu.memory_space<vmem>>, %arg6: memref<1x1xf32, #tpu.memory_space<vmem>>, %arg7: memref<1x128xf32, #tpu.memory_space<vmem>>) attributes {dimension_semantics = [], scalar_prefetch = 0 : i64, scratch_operands = 0 : i64, tpu.core_type = #tpu.core_type<tc>} {
    %c0 = arith.constant 0 : index
    %c0_0 = arith.constant 0 : index
    %0 = vector.load %arg1[%c0, %c0_0] : memref<32x4xf32, #tpu.memory_space<vmem>>, vector<32x4xf32>
    %c0_1 = arith.constant 0 : index
    %c0_2 = arith.constant 0 : index
    %1 = vector.load %arg3[%c0_1, %c0_2] : memref<32x32xf32, #tpu.memory_space<vmem>>, vector<32x32xf32>
    %c0_3 = arith.constant 0 : index
    %c0_4 = arith.constant 0 : index
    %2 = vector.load %arg5[%c0_3, %c0_4] : memref<32x1xf32, #tpu.memory_space<vmem>>, vector<32x1xf32>
    %c0_5 = arith.constant 0 : index
    %c0_6 = arith.constant 0 : index
    %3 = vector.load %arg2[%c0_5, %c0_6] : memref<32x1xf32, #tpu.memory_space<vmem>>, vector<32x1xf32>
    %c0_7 = arith.constant 0 : index
    %c0_8 = arith.constant 0 : index
    %4 = vector.load %arg4[%c0_7, %c0_8] : memref<32x1xf32, #tpu.memory_space<vmem>>, vector<32x1xf32>
    %c0_9 = arith.constant 0 : index
    %c0_10 = arith.constant 0 : index
    %5 = vector.load %arg6[%c0_9, %c0_10] : memref<1x1xf32, #tpu.memory_space<vmem>>, vector<1x1xf32>
    %c0_i32 = arith.constant 0 : i32
    %c1_i32 = arith.constant 1 : i32
    %6 = arith.muli %c0_i32, %c1_i32 : i32
    %c0_i32_11 = arith.constant 0 : i32
    %7 = arith.addi %c0_i32_11, %6 : i32
    %c128_i32 = arith.constant 128 : i32
    %8 = arith.muli %7, %c128_i32 : i32
    %9 = tpu.assume_multiple %8, 128 : i32
    %c0_12 = arith.constant 0 : index
    %10 = arith.index_cast %9 : i32 to index
    %11 = vector.load %arg0[%c0_12, %10] : memref<4x128xf32, #tpu.memory_space<vmem>>, vector<4x128xf32>
    %12 = vector.extract_strided_slice %0 {offsets = [0, 0], sizes = [32, 1], strides = [1, 1]} : vector<32x4xf32> to vector<32x1xf32>
    %13 = vector.extract_strided_slice %11 {offsets = [0, 0], sizes = [1, 128], strides = [1, 1]} : vector<4x128xf32> to vector<1x128xf32>
    %14 = vector.broadcast %12 : vector<32x1xf32> to vector<32x128xf32>
    %15 = vector.broadcast %13 : vector<1x128xf32> to vector<32x128xf32>
    %16 = arith.mulf %14, %15 : vector<32x128xf32>
    %17 = vector.extract_strided_slice %0 {offsets = [0, 1], sizes = [32, 1], strides = [1, 1]} : vector<32x4xf32> to vector<32x1xf32>
    %18 = vector.extract_strided_slice %11 {offsets = [1, 0], sizes = [1, 128], strides = [1, 1]} : vector<4x128xf32> to vector<1x128xf32>
    %19 = vector.broadcast %17 : vector<32x1xf32> to vector<32x128xf32>
    %20 = vector.broadcast %18 : vector<1x128xf32> to vector<32x128xf32>
    %21 = arith.mulf %19, %20 : vector<32x128xf32>
    %22 = arith.addf %16, %21 : vector<32x128xf32>
    %23 = vector.extract_strided_slice %0 {offsets = [0, 2], sizes = [32, 1], strides = [1, 1]} : vector<32x4xf32> to vector<32x1xf32>
    %24 = vector.extract_strided_slice %11 {offsets = [2, 0], sizes = [1, 128], strides = [1, 1]} : vector<4x128xf32> to vector<1x128xf32>
    %25 = vector.broadcast %23 : vector<32x1xf32> to vector<32x128xf32>
    %26 = vector.broadcast %24 : vector<1x128xf32> to vector<32x128xf32>
    %27 = arith.mulf %25, %26 : vector<32x128xf32>
    %28 = arith.addf %22, %27 : vector<32x128xf32>
    %29 = vector.extract_strided_slice %0 {offsets = [0, 3], sizes = [32, 1], strides = [1, 1]} : vector<32x4xf32> to vector<32x1xf32>
    %30 = vector.extract_strided_slice %11 {offsets = [3, 0], sizes = [1, 128], strides = [1, 1]} : vector<4x128xf32> to vector<1x128xf32>
    %31 = vector.broadcast %29 : vector<32x1xf32> to vector<32x128xf32>
    %32 = vector.broadcast %30 : vector<1x128xf32> to vector<32x128xf32>
    %33 = arith.mulf %31, %32 : vector<32x128xf32>
    %34 = arith.addf %28, %33 : vector<32x128xf32>
    %35 = vector.broadcast %3 : vector<32x1xf32> to vector<32x128xf32>
    %36 = arith.addf %34, %35 : vector<32x128xf32>
    %37 = math.tanh %36 : vector<32x128xf32>
    %cst = arith.constant dense<0.000000e+00> : vector<32x128xf32>
    %38 = tpu.matmul %1, %37, %cst {dimension_numbers = #tpu.dot_dimension_numbers<[1], [0], [0], [1], [0, 0, 1, 1], [], []>} : vector<32x32xf32>, vector<32x128xf32>, vector<32x128xf32> -> vector<32x128xf32>
    %39 = vector.broadcast %4 : vector<32x1xf32> to vector<32x128xf32>
    %40 = arith.addf %38, %39 : vector<32x128xf32>
    %41 = math.tanh %40 : vector<32x128xf32>
    %42 = vector.broadcast %2 : vector<32x1xf32> to vector<32x128xf32>
    %43 = arith.mulf %41, %42 : vector<32x128xf32>
    %cst_13 = arith.constant dense<0.000000e+00> : vector<128xf32>
    %44 = vector.multi_reduction <add>, %43, %cst_13 [0] : vector<32x128xf32> to vector<128xf32>
    %45 = vector.shape_cast %44 : vector<128xf32> to vector<1x128xf32>
    %46 = vector.broadcast %5 : vector<1x1xf32> to vector<1x128xf32>
    %47 = arith.addf %45, %46 : vector<1x128xf32>
    %c0_14 = arith.constant 0 : index
    %48 = arith.index_cast %9 : i32 to index
    %49 = vector.load %arg7[%c0_14, %48] : memref<1x128xf32, #tpu.memory_space<vmem>>, vector<1x128xf32>
    tpu.vector_store %arg7[%c0_14, %48], %47 {strides = array<i32>} : memref<1x128xf32, #tpu.memory_space<vmem>>, vector<1x128xf32>,
    %c1_i32_15 = arith.constant 1 : i32
    return
  }
}

</mosaic_0001>

<llo_original>
// kernel: tpu_custom_call.1
$region0: #{tpu_custom_call.1}
  #allocation0 [shape = 'u32[]', space=smem, size = 0x4, offset = 0x4, fixed_abs, tag = 'smem constant byte address 0x4 - core index']
  #allocation1 [shape = 'u32[144,128]{1,0:T(1,128)}', space=vmem, size = 0x12000, scoped, tag = 'internal scratch']
  #allocation2 [shape = 'f32[1,1]{1,0:T(1,128)S(1)}', space=vmem, size = 0x200, scoped, tag = 'scoped memory for tpu_custom_call.1']
  %s0 = inlined_call_operand.vmem [shape: f32[4,128], index: 0, kind: input, shape index: {}]
  %s1 = inlined_call_operand.vmem [shape: f32[32,4], index: 1, kind: input, shape index: {}]
  %s2 = inlined_call_operand.vmem [shape: f32[32,1], index: 2, kind: input, shape index: {}]
  %s3 = inlined_call_operand.vmem [shape: f32[32,32], index: 3, kind: input, shape index: {}]
  %s4 = inlined_call_operand.vmem [shape: f32[32,1], index: 4, kind: input, shape index: {}]
  %s5 = inlined_call_operand.vmem [shape: f32[32,1], index: 5, kind: input, shape index: {}]
  %s6 = inlined_call_operand.<no memory space> [shape: f32[1,1], index: 6, kind: input, shape index: {}]
  %s7 = inlined_call_operand.hbm [shape: f32[1,128], index: 7, kind: output, shape index: {}]
  %s8 = sld [smem:[#allocation0]]
  $region38: #{tpu_custom_call.1} parent=0
    _
  %s10 = ssub.s32 1, %s8
  %s11 = scalar_select 0, %s10, %s8
  %v12 = vstv %s6
  %13 = vst [vmem:[#allocation2] sm:$0x1] %v12
  $region1: #{tpu_custom_call.1} parent=0
    #allocation3 [shape = 'u8[512]{0}', space=vmem, size = 0x400, scoped, tag = 'output window, operand 0, single buffered']
    #allocation4 [shape = 's32[1]{0}', space=sflag, size = 0x4, scoped, tag = 'scoped memory for tpu_custom_call.1']
    %14 = vsyncpa [#allocation4], 0
    // Predicated region
    $region2: #{tpu_custom_call.1} parent=1 // pred_check
      _
    $region3: #{tpu_custom_call.1} parent=1 // pred_check_branch
      %16 = sbr.rel (0) target = $region5
    $region4: #{tpu_custom_call.1} parent=1 // pred_region
      _
    $region5: #{tpu_custom_call.1} parent=1 // pred_fallthru
      _
    // Predicated region
    $region6: #{tpu_custom_call.1} parent=1 // pred_check
      _
    $region7: #{tpu_custom_call.1} parent=1 // pred_check_branch
      %18 = sbr.rel (0) target = $region9
    $region8: #{tpu_custom_call.1} parent=1 // pred_region
      _
    $region9: #{tpu_custom_call.1} parent=1 // pred_fallthru
      _
    // Predicated region
    $region10: #{tpu_custom_call.1} parent=1 // pred_check
      _
    $region11: #{tpu_custom_call.1} parent=1 // pred_check_branch
      %20 = sbr.rel (0) target = $region13
    $region12: #{tpu_custom_call.1} parent=1 // pred_region
      _
    $region13: #{tpu_custom_call.1} parent=1 // pred_fallthru
      _
    // Predicated region
    $region14: #{tpu_custom_call.1} parent=1 // pred_check
      _
    $region15: #{tpu_custom_call.1} parent=1 // pred_check_branch
      %22 = sbr.rel (0) target = $region17
    $region16: #{tpu_custom_call.1} parent=1 // pred_region
      _
    $region17: #{tpu_custom_call.1} parent=1 // pred_fallthru
      _
    // Predicated region
    $region18: #{tpu_custom_call.1} parent=1 // pred_check
      _
    $region19: #{tpu_custom_call.1} parent=1 // pred_check_branch
      %24 = sbr.rel (0) target = $region21
    $region20: #{tpu_custom_call.1} parent=1 // pred_region
      _
    $region21: #{tpu_custom_call.1} parent=1 // pred_fallthru
      _
    // Predicated region
    $region22: #{tpu_custom_call.1} parent=1 // pred_check
      _
    $region23: #{tpu_custom_call.1} parent=1 // pred_check_branch
      %26 = sbr.rel (0) target = $region25
    $region24: #{tpu_custom_call.1} parent=1 // pred_region
      _
    $region25: #{tpu_custom_call.1} parent=1 // pred_fallthru
      _
    // Predicated region
    $region26: #{tpu_custom_call.1} parent=1 // pred_check
      _
    $region27: #{tpu_custom_call.1} parent=1 // pred_check_branch
      %28 = sbr.rel (0) target = $region29
    $region28: #{tpu_custom_call.1} parent=1 // pred_region
      _
    $region29: #{tpu_custom_call.1} parent=1 // pred_fallthru
      _
    %v29 = vld [vmem:[%s1] sm:$0xff]
    %v30 = vld [vmem:[%s1 + $0x8] sm:$0xff]
    %v31 = vld [vmem:[%s1 + $0x10] sm:$0xff]
    %v32 = vld [vmem:[%s1 + $0x18] sm:$0xff]
    %v33 = vld [vmem:[%s3] sm:$0xff]
    %v34 = vld [vmem:[%s3 + $0x8] sm:$0xff]
    %v35 = vld [vmem:[%s3 + $0x10] sm:$0xff]
    %v36 = vld [vmem:[%s3 + $0x18] sm:$0xff]
    %v37 = vld [vmem:[%s5] sm:$0xff]
    %v38 = vld [vmem:[%s5 + $0x8] sm:$0xff]
    %v39 = vld [vmem:[%s5 + $0x10] sm:$0xff]
    %v40 = vld [vmem:[%s5 + $0x18] sm:$0xff]
    %v41 = vld [vmem:[%s2] sm:$0xff]
    %v42 = vld [vmem:[%s2 + $0x8] sm:$0xff]
    %v43 = vld [vmem:[%s2 + $0x10] sm:$0xff]
    %v44 = vld [vmem:[%s2 + $0x18] sm:$0xff]
    %v45 = vld [vmem:[%s4] sm:$0xff]
    %v46 = vld [vmem:[%s4 + $0x8] sm:$0xff]
    %v47 = vld [vmem:[%s4 + $0x10] sm:$0xff]
    %v48 = vld [vmem:[%s4 + $0x18] sm:$0xff]
    %v49 = vld [vmem:[#allocation2] sm:$0x1]
    %v50 = vld [vmem:[%s0] sm:$0xf]
    %52 = vset.pattern.permute.xlu0 0
    %53 = vperm.xlu0 %52, %v29
    %v54 = vpop.permute.xlu0 %53
    %57 = vset.pattern.permute.xlu0 0
    %58 = vperm.xlu0 %57, %v30
    %v59 = vpop.permute.xlu0 %58
    %62 = vset.pattern.permute.xlu0 0
    %63 = vperm.xlu0 %62, %v31
    %v64 = vpop.permute.xlu0 %63
    %67 = vset.pattern.permute.xlu0 0
    %68 = vperm.xlu0 %67, %v32
    %v69 = vpop.permute.xlu0 %68
    %v71 = vlaneseq
    %v72 = vshrl.u32 %v71, 7
    %v73 = vsub.s32 0, %v72
    %v74 = vrot.slane %v50, %v73
    %v75 = vmul.f32 %v54, %v74
    %v76 = vmul.f32 %v59, %v74
    %v77 = vmul.f32 %v64, %v74
    %v78 = vmul.f32 %v69, %v74
    %79 = vset.pattern.permute.xlu0 1
    %80 = vperm.xlu0 %79, %v29
    %v81 = vpop.permute.xlu0 %80
    %83 = vset.pattern.permute.xlu0 1
    %84 = vperm.xlu0 %83, %v30
    %v85 = vpop.permute.xlu0 %84
    %87 = vset.pattern.permute.xlu0 1
    %88 = vperm.xlu0 %87, %v31
    %v89 = vpop.permute.xlu0 %88
    %91 = vset.pattern.permute.xlu0 1
    %92 = vperm.xlu0 %91, %v32
    %v93 = vpop.permute.xlu0 %92
    %v95 = vlaneseq
    %v96 = vshrl.u32 %v95, 7
    %v97 = vsub.s32 1, %v96
    %v98 = vrot.slane %v50, %v97
    %v99 = vmul.f32 %v81, %v98
    %v100 = vmul.f32 %v85, %v98
    %v101 = vmul.f32 %v89, %v98
    %v102 = vmul.f32 %v93, %v98
    %v103 = vadd.f32 %v75, %v99
    %v104 = vadd.f32 %v76, %v100
    %v105 = vadd.f32 %v77, %v101
    %v106 = vadd.f32 %v78, %v102
    %107 = vset.pattern.permute.xlu0 2
    %108 = vperm.xlu0 %107, %v29
    %v109 = vpop.permute.xlu0 %108
    %111 = vset.pattern.permute.xlu0 2
    %112 = vperm.xlu0 %111, %v30
    %v113 = vpop.permute.xlu0 %112
    %115 = vset.pattern.permute.xlu0 2
    %116 = vperm.xlu0 %115, %v31
    %v117 = vpop.permute.xlu0 %116
    %119 = vset.pattern.permute.xlu0 2
    %120 = vperm.xlu0 %119, %v32
    %v121 = vpop.permute.xlu0 %120
    %v123 = vlaneseq
    %v124 = vshrl.u32 %v123, 7
    %v125 = vsub.s32 2, %v124
    %v126 = vrot.slane %v50, %v125
    %v127 = vmul.f32 %v109, %v126
    %v128 = vmul.f32 %v113, %v126
    %v129 = vmul.f32 %v117, %v126
    %v130 = vmul.f32 %v121, %v126
    %v131 = vadd.f32 %v103, %v127
    %v132 = vadd.f32 %v104, %v128
    %v133 = vadd.f32 %v105, %v129
    %v134 = vadd.f32 %v106, %v130
    %135 = vset.pattern.permute.xlu0 3
    %136 = vperm.xlu0 %135, %v29
    %v137 = vpop.permute.xlu0 %136
    %139 = vset.pattern.permute.xlu0 3
    %140 = vperm.xlu0 %139, %v30
    %v141 = vpop.permute.xlu0 %140
    %143 = vset.pattern.permute.xlu0 3
    %144 = vperm.xlu0 %143, %v31
    %v145 = vpop.permute.xlu0 %144
    %147 = vset.pattern.permute.xlu0 3
    %148 = vperm.xlu0 %147, %v32
    %v149 = vpop.permute.xlu0 %148
    %v151 = vlaneseq
    %v152 = vshrl.u32 %v151, 7
    %v153 = vsub.s32 3, %v152
    %v154 = vrot.slane %v50, %v153
    %v155 = vmul.f32 %v137, %v154
    %v156 = vmul.f32 %v141, %v154
    %v157 = vmul.f32 %v145, %v154
    %v158 = vmul.f32 %v149, %v154
    %v159 = vadd.f32 %v131, %v155
    %v160 = vadd.f32 %v132, %v156
    %v161 = vadd.f32 %v133, %v157
    %v162 = vadd.f32 %v134, %v158
    %164 = vset.pattern.permute.xlu0 0
    %165 = vperm.xlu0 %164, %v41
    %v166 = vpop.permute.xlu0 %165
    %169 = vset.pattern.permute.xlu0 0
    %170 = vperm.xlu0 %169, %v42
    %v171 = vpop.permute.xlu0 %170
    %174 = vset.pattern.permute.xlu0 0
    %175 = vperm.xlu0 %174, %v43
    %v176 = vpop.permute.xlu0 %175
    %179 = vset.pattern.permute.xlu0 0
    %180 = vperm.xlu0 %179, %v44
    %v181 = vpop.permute.xlu0 %180
    %v183 = vadd.f32 %v159, %v166
    %v184 = vadd.f32 %v160, %v171
    %v185 = vadd.f32 %v161, %v176
    %v186 = vadd.f32 %v162, %v181
    %v187 = vtanh.pop %v183
    %v188 = vtanh.pop %v184
    %v189 = vtanh.pop %v185
    %v190 = vtanh.pop %v186
    %192 = vset.pattern.permute.xlu0 0
    %193 = vperm.xlu0 %192, %v45
    %v194 = vpop.permute.xlu0 %193
    %197 = vset.pattern.permute.xlu0 0
    %198 = vperm.xlu0 %197, %v46
    %v199 = vpop.permute.xlu0 %198
    %202 = vset.pattern.permute.xlu0 0
    %203 = vperm.xlu0 %202, %v47
    %v204 = vpop.permute.xlu0 %203
    %207 = vset.pattern.permute.xlu0 0
    %208 = vperm.xlu0 %207, %v48
    %v209 = vpop.permute.xlu0 %208
    %vm211 = vcmask 261120
    %v213 = vsel %vm211, %v33, 0
    %v216 = vsel %vm211, %v34, 0
    %v219 = vsel %vm211, %v35, 0
    %v222 = vsel %vm211, %v36, 0
    %224 = vmatprep.subr.mxu0 0.0
    %225 = vmatpush1.msra.mxu0 %v187
    %226 = vmatprep.subr.mxu0 0.0
    %227 = vmatpush1.msra.mxu0 %v188
    %228 = vmatprep.subr.mxu0 0.0
    %229 = vmatpush1.msra.mxu0 %v189
    %230 = vmatprep.subr.mxu0 0.0
    %231 = vmatpush1.msra.mxu0 %v190
    %232 = vmatprep.subr.mxu0 0.0
    %233 = vmatpush1.msra.mxu0 0.0
    %234 = vmatprep.subr.mxu0 0.0
    %235 = vmatpush1.msra.mxu0 0.0
    %236 = vmatprep.subr.mxu0 0.0
    %237 = vmatpush1.msra.mxu0 0.0
    %238 = vmatprep.subr.mxu0 0.0
    %239 = vmatpush1.msra.mxu0 0.0
    %240 = vmatprep.subr.mxu0 0.0
    %241 = vmatpush1.msra.mxu0 0.0
    %242 = vmatprep.subr.mxu0 0.0
    %243 = vmatpush1.msra.mxu0 0.0
    %244 = vmatprep.subr.mxu0 0.0
    %245 = vmatpush1.msra.mxu0 0.0
    %246 = vmatprep.subr.mxu0 0.0
    %247 = vmatpush1.msra.mxu0 0.0
    %248 = vmatprep.subr.mxu0 0.0
    %249 = vmatpush1.msra.mxu0 0.0
    %250 = vmatprep.subr.mxu0 0.0
    %251 = vmatpush1.msra.mxu0 0.0
    %252 = vmatprep.subr.mxu0 0.0
    %253 = vmatpush1.msra.mxu0 0.0
    %254 = vmatprep.subr.mxu0 0.0
    %255 = vmatpush1.msra.mxu0 0.0
    %256 = vmatprep.subr.mxu0 0.0
    %257 = vmatpush1.msra.mxu0 0.0
    %258 = vmatprep.subr.mxu0 0.0
    %259 = vmatpush1.msra.mxu0 0.0
    %260 = vmatprep.subr.mxu0 0.0
    %261 = vmatpush1.msra.mxu0 0.0
    %262 = vmatprep.subr.mxu0 0.0
    %263 = vmatpush1.msra.mxu0 0.0
    %264 = vmatprep.subr.mxu0 0.0
    %265 = vmatpush1.msra.mxu0 0.0
    %266 = vmatprep.subr.mxu0 0.0
    %267 = vmatpush1.msra.mxu0 0.0
    %268 = vmatprep.subr.mxu0 0.0
    %269 = vmatpush1.msra.mxu0 0.0
    %270 = vmatprep.subr.mxu0 0.0
    %271 = vmatpush1.msra.mxu0 0.0
    %272 = vmatprep.subr.mxu0 0.0
    %273 = vmatpush1.msra.mxu0 0.0
    %274 = vmatprep.subr.mxu0 0.0
    %275 = vmatpush1.msra.mxu0 0.0
    %276 = vmatprep.subr.mxu0 0.0
    %277 = vmatpush1.msra.mxu0 0.0
    %278 = vmatprep.subr.mxu0 0.0
    %279 = vmatpush1.msra.mxu0 0.0
    %280 = vmatprep.subr.mxu0 0.0
    %281 = vmatpush1.msra.mxu0 0.0
    %282 = vmatprep.subr.mxu0 0.0
    %283 = vmatpush1.msra.mxu0 0.0
    %284 = vmatprep.subr.mxu0 0.0
    %285 = vmatpush1.msra.mxu0 0.0
    %286 = vmatprep.subr.mxu0 0.0
    %287 = vmatpush1.msra.mxu0 0.0
    %288 = vmatprep.mubr.f32.mxu0 0.0
    %289 = vmatmul.mubr.f32.gmra.mrb[0].mxu0 %v213
    %v290 = vpop.f32.mrb[0].mxu0
    %v291 = vadd.f32 %v194, %v290
    %v292 = vpop.f32.mrb[0].mxu0
    %293 = vmatprep.mubr.f32.mxu0 0.0
    %294 = vmatmul.mubr.f32.gmra.mrb[0].mxu0 %v216
    %v295 = vpop.f32.mrb[0].mxu0
    %v296 = vadd.f32 %v199, %v295
    %v297 = vpop.f32.mrb[0].mxu0
    %298 = vmatprep.mubr.f32.mxu0 0.0
    %299 = vmatmul.mubr.f32.gmra.mrb[0].mxu0 %v219
    %v300 = vpop.f32.mrb[0].mxu0
    %v301 = vadd.f32 %v204, %v300
    %v302 = vpop.f32.mrb[0].mxu0
    %303 = vmatprep.mubr.f32.mxu0 0.0
    %304 = vmatmul.mubr.f32.gmra.mrb[0].mxu0 %v222
    %v305 = vpop.f32.mrb[0].mxu0
    %v306 = vadd.f32 %v209, %v305
    %v307 = vpop.f32.mrb[0].mxu0
    %308 = vdwg.mxu0
    %v309 = vtanh.pop %v291
    %v310 = vtanh.pop %v296
    %v311 = vtanh.pop %v301
    %v312 = vtanh.pop %v306
    %314 = vset.pattern.permute.xlu0 0
    %315 = vperm.xlu0 %314, %v37
    %v316 = vpop.permute.xlu0 %315
    %319 = vset.pattern.permute.xlu0 0
    %320 = vperm.xlu0 %319, %v38
    %v321 = vpop.permute.xlu0 %320
    %324 = vset.pattern.permute.xlu0 0
    %325 = vperm.xlu0 %324, %v39
    %v326 = vpop.permute.xlu0 %325
    %329 = vset.pattern.permute.xlu0 0
    %330 = vperm.xlu0 %329, %v40
    %v331 = vpop.permute.xlu0 %330
    %v333 = vmul.f32 %v309, %v316
    %v334 = vmul.f32 %v310, %v321
    %v335 = vmul.f32 %v311, %v326
    %v336 = vmul.f32 %v312, %v331
    %v337 = vadd.f32 %v333, %v334
    %v338 = vadd.f32 %v337, %v335
    %v339 = vadd.f32 %v338, %v336
    %v340 = vrot.slane %v339, 4
    %v341 = vadd.f32 %v339, %v340
    %v342 = vrot.slane %v341, 2
    %v343 = vadd.f32 %v341, %v342
    %v344 = vrot.slane %v343, 1
    %v345 = vadd.f32 %v343, %v344
    %347 = vset.pattern.permute.xlu0 0
    %348 = vperm.xlu0 %347, %v49
    %v349 = vpop.permute.xlu0 %348
    %v351 = vlaneseq
    %v352 = vshrl.u32 %v351, 7
    %v353 = vsub.s32 0, %v352
    %v354 = vrot.slane %v349, %v353
    %v355 = vadd.f32 %v345, %v354
    %356 = vst [vmem:[#allocation3] sm:$0x1] %v355
    // Predicated region
    $region30: #{tpu_custom_call.1} parent=1 // pred_check
      _
    $region31: #{tpu_custom_call.1} parent=1 // pred_check_branch
      %358 = sbr.rel (0) target = $region33
    $region32: #{tpu_custom_call.1} parent=1 // pred_region
      %s360 = ssub.s32 16, 16
      %361 = vsyncadd [#allocation4], %s360
      %s363 = sshll.u32 [#allocation3], 4
      %s364 = int_to_ptr.vmem [resolvable:$true] %s363
      %366 = dma.vmem_to_hbm [thread:$0]  %s364, 16, %s7, [#allocation4]
    $region33: #{tpu_custom_call.1} parent=1 // pred_fallthru
      _
    // Predicated region
    $region34: #{tpu_custom_call.1} parent=1 // pred_check
      _
    $region35: #{tpu_custom_call.1} parent=1 // pred_check_branch
      %368 = sbr.rel (0) target = $region37
    $region36: #{tpu_custom_call.1} parent=1 // pred_region
      %369 = dma.done [#allocation4], 16
    $region37: #{tpu_custom_call.1} parent=1 // pred_fallthru
      _
    %370 = vsyncpa [#allocation4], 1

</llo_original>
